<compile_context>
chip_gen: v7x
topology: tpu7x:2x2x1
jax: 0.10.0
libtpu: 0.0.40
codegen_flags: <defaults>
</compile_context>

<pallas_src>
import functools

import jax
import jax.numpy as jnp
from jax.experimental import pallas as pl
from jax.experimental.pallas import tpu as pltpu

IN_F, H1, H2, OUT_F = 28 * 28, 128, 64, 10   # logical sizes (PyTorch module)
H1_P, H2_P, OUT_P = 128, 128, 128            # lane-dense padded feature sizes


def _round_up(x, m):
    return (x + m - 1) // m * m


def _choose_tb(B, tb):
    """Pick a batch tile: multiple of 8, <= ~tb, and >= 2 grid steps when possible."""
    TB = max(8, _round_up(min(tb, B), 8))
    if pl.cdiv(B, TB) == 1 and B >= 16:
        TB = _round_up(pl.cdiv(B, 2), 8)     # split so v7x uses both TensorCores
    return TB


def mlp_kernel(x_ref, w1_ref, b1_ref, w2_ref, b2_ref, w3_ref, b3_ref, o_ref):
    # Cast the raw f32 input tile to bf16 on the VPU (free under mem-bound roofline).
    x = x_ref[...].astype(jnp.bfloat16)
    # fc1 + relu  (bf16 MXU inputs, f32 accumulation / elementwise)
    h1 = jnp.dot(x, w1_ref[...], preferred_element_type=jnp.float32)
    h1 = jnp.maximum(h1 + b1_ref[...], 0.0)
    # fc2 + relu  (hidden2 zero-padded 64 -> 128; exact semantics)
    h2 = jnp.dot(h1.astype(jnp.bfloat16), w2_ref[...],
                 preferred_element_type=jnp.float32)
    h2 = jnp.maximum(h2 + b2_ref[...], 0.0)
    # fc3 (no activation); padded output columns have exactly-zero weights/bias.
    out = jnp.dot(h2.astype(jnp.bfloat16), w3_ref[...],
                  preferred_element_type=jnp.float32)
    o_ref[...] = (out + b3_ref[...]).astype(o_ref.dtype)


def pack_params(params):
    """One-time weight packing: lane-dense zero-padding + bf16 cast (exact semantics)."""
    w1, b1, w2, b2, w3, b3 = params          # f32, weights stored (in, out)
    w1p = w1.astype(jnp.bfloat16)                                           # (784,128)
    b1p = b1.reshape(1, H1).astype(jnp.float32)                             # (1,128)
    w2p = jnp.pad(w2, ((0, 0), (0, H2_P - H2))).astype(jnp.bfloat16)        # (128,128)
    b2p = jnp.pad(b2.reshape(1, -1), ((0, 0), (0, H2_P - H2)))              # (1,128)
    w3p = jnp.pad(w3, ((0, H2_P - H2), (0, OUT_P - OUT_F))).astype(jnp.bfloat16)  # (128,128)
    b3p = jnp.pad(b3.reshape(1, -1), ((0, 0), (0, OUT_P - OUT_F)))          # (1,128)
    return (w1p, b1p, w2p, b2p.astype(jnp.float32), w3p, b3p.astype(jnp.float32))


@functools.partial(jax.jit, static_argnames=("tb",))
def simple_nn_forward(x_nchw, packed_params, *, tb=2048):
    w1p, b1p, w2p, b2p, w3p, b3p = packed_params
    B = x_nchw.shape[0]
    x = x_nchw.reshape(B, IN_F).astype(jnp.float32)   # torch.flatten(x, 1); no copy

    TB = _choose_tb(B, tb)
    steps = pl.cdiv(B, TB)
    Bp = steps * TB            # output rows (last input block is ragged, Pallas clips)

    flops = 2 * B * (IN_F * H1 + H1 * H2 + H2 * OUT_F)
    bytes_accessed = (B * IN_F * 4                      # raw f32 x stream
                      + Bp * OUT_P * 2                  # bf16 padded output
                      + (IN_F * H1_P + H1_P * H2_P + H2_P * OUT_P) * 2
                      + (H1_P + H2_P + OUT_P) * 4)

    const = lambda i: (0, 0)   # weights/biases stay VMEM-resident across grid steps

    out = pl.pallas_call(
        mlp_kernel,
        out_shape=jax.ShapeDtypeStruct((Bp, OUT_P), jnp.bfloat16),
        grid=(steps,),
        in_specs=[
            pl.BlockSpec((TB, IN_F), lambda i: (i, 0)),   # streamed raw f32 x tiles
            pl.BlockSpec((IN_F, H1_P), const),            # w1 (resident, bf16)
            pl.BlockSpec((1, H1_P), const),               # b1 (f32)
            pl.BlockSpec((H1_P, H2_P), const),            # w2
            pl.BlockSpec((1, H2_P), const),               # b2
            pl.BlockSpec((H2_P, OUT_P), const),           # w3
            pl.BlockSpec((1, OUT_P), const),              # b3
        ],
        out_specs=pl.BlockSpec((TB, OUT_P), lambda i: (i, 0)),
        compiler_params=pltpu.CompilerParams(
            dimension_semantics=("parallel",),
            vmem_limit_bytes=48 * 1024 * 1024),
        cost_estimate=pl.CostEstimate(
            flops=flops, bytes_accessed=bytes_accessed, transcendentals=0),
    )(x, w1p, b1p, w2p, b2p, w3p, b3p)

    # Slice off padded rows/columns; module returns f32 logits.
    return out[:B, :OUT_F].astype(jnp.float32)


def init_params(key):
    """Deterministic init mimicking PyTorch nn.Linear default U(-1/sqrt(fan_in), +)."""
    def linear(key, fan_in, fan_out):
        kw, kb = jax.random.split(key)
        bound = 1.0 / jnp.sqrt(fan_in)
        w = jax.random.uniform(kw, (fan_in, fan_out), jnp.float32, -bound, bound)
        b = jax.random.uniform(kb, (fan_out,), jnp.float32, -bound, bound)
        return w, b

    k1, k2, k3 = jax.random.split(key, 3)
    w1, b1 = linear(k1, IN_F, H1)
    w2, b2 = linear(k2, H1, H2)
    w3, b3 = linear(k3, H2, OUT_F)
    return (w1, b1, w2, b2, w3, b3)


def reference_forward(x_nchw, params):
    """Pure-JAX reference mimicking the kernel numerics (bf16 operands, f32 accum)."""
    w1, b1, w2, b2, w3, b3 = params
    x = x_nchw.reshape(x_nchw.shape[0], -1).astype(jnp.bfloat16)
    h1 = jnp.dot(x, w1.astype(jnp.bfloat16),
                 preferred_element_type=jnp.float32) + b1
    h1 = jnp.maximum(h1, 0.0)
    h2 = jnp.dot(h1.astype(jnp.bfloat16), w2.astype(jnp.bfloat16),
                 preferred_element_type=jnp.float32) + b2
    h2 = jnp.maximum(h2, 0.0)
    out = jnp.dot(h2.astype(jnp.bfloat16), w3.astype(jnp.bfloat16),
                  preferred_element_type=jnp.float32) + b3
    return out.astype(jnp.bfloat16).astype(jnp.float32)   # kernel stores bf16 logits


if __name__ == "__main__":
    key = jax.random.PRNGKey(0)
    kx, kp = jax.random.split(key)

    # MNIST-like input: batch=2, channels=1, 28x28 (PyTorch NCHW layout)
    x = jax.random.normal(kx, (2, 1, 28, 28), dtype=jnp.float32)
    params = init_params(kp)
    packed = pack_params(params)            # one-time, outside the jitted forward

    out = jax.block_until_ready(simple_nn_forward(x, packed))
    ref = reference_forward(x, params)
    assert out.shape == (2, 10)
    assert jnp.allclose(out, ref, atol=2e-2, rtol=2e-2), "mismatch vs JAX reference"

    # Also exercise a batch that is not a multiple of the tile size (ragged last block).
    x_big = jax.random.normal(kx, (37, 1, 28, 28), dtype=jnp.float32)
    out_big = jax.block_until_ready(simple_nn_forward(x_big, packed))
    ref_big = reference_forward(x_big, params)
    assert out_big.shape == (37, 10)
    assert jnp.allclose(out_big, ref_big, atol=2e-2, rtol=2e-2), "mismatch (big batch)"

    print("KERNEL_OK")
</pallas_src>

<mosaic_0001>
module attributes {stable_mosaic.version = 11 : i64} {
  func.func @mlp_kernel(%arg0: i32, %arg1: memref<8x784xf32, #tpu.memory_space<vmem>>, %arg2: memref<784x128xbf16, #tpu.memory_space<vmem>>, %arg3: memref<1x128xf32, #tpu.memory_space<vmem>>, %arg4: memref<128x128xbf16, #tpu.memory_space<vmem>>, %arg5: memref<1x128xf32, #tpu.memory_space<vmem>>, %arg6: memref<128x128xbf16, #tpu.memory_space<vmem>>, %arg7: memref<1x128xf32, #tpu.memory_space<vmem>>, %arg8: memref<8x128xbf16, #tpu.memory_space<vmem>>) attributes {dimension_semantics = [#tpu.dimension_semantics<parallel>], iteration_bounds = array<i64: 1>, scalar_prefetch = 0 : i64, scratch_operands = 0 : i64, tpu.core_type = #tpu.core_type<tc>, window_params = [{transform_indices = @transform_0, window_bounds = array<i64: 8, 784>}, {pipeline_mode = #tpu.pipeline_mode<synchronous>, transform_indices = @transform_1, window_bounds = array<i64: 784, 128>}, {pipeline_mode = #tpu.pipeline_mode<synchronous>, transform_indices = @transform_2, window_bounds = array<i64: 1, 128>}, {pipeline_mode = #tpu.pipeline_mode<synchronous>, transform_indices = @transform_3, window_bounds = array<i64: 128, 128>}, {pipeline_mode = #tpu.pipeline_mode<synchronous>, transform_indices = @transform_4, window_bounds = array<i64: 1, 128>}, {pipeline_mode = #tpu.pipeline_mode<synchronous>, transform_indices = @transform_5, window_bounds = array<i64: 128, 128>}, {pipeline_mode = #tpu.pipeline_mode<synchronous>, transform_indices = @transform_6, window_bounds = array<i64: 1, 128>}, {transform_indices = @transform_7, window_bounds = array<i64: 8, 128>}]} {
    %c0 = arith.constant 0 : index
    %c0_0 = arith.constant 0 : index
    %0 = vector.load %arg1[%c0, %c0_0] : memref<8x784xf32, #tpu.memory_space<vmem>>, vector<8x784xf32>
    %1 = arith.truncf %0 : vector<8x784xf32> to vector<8x784xbf16>
    %c0_1 = arith.constant 0 : index
    %c0_2 = arith.constant 0 : index
    %2 = vector.load %arg2[%c0_1, %c0_2] : memref<784x128xbf16, #tpu.memory_space<vmem>>, vector<784x128xbf16>
    %cst = arith.constant dense<0.000000e+00> : vector<8x128xf32>
    %3 = tpu.matmul %1, %2, %cst {dimension_numbers = #tpu.dot_dimension_numbers<[1], [0], [0], [1], [0, 0, 1, 1], [], []>} : vector<8x784xbf16>, vector<784x128xbf16>, vector<8x128xf32> -> vector<8x128xf32>
    %c0_3 = arith.constant 0 : index
    %c0_4 = arith.constant 0 : index
    %4 = vector.load %arg3[%c0_3, %c0_4] : memref<1x128xf32, #tpu.memory_space<vmem>>, vector<1x128xf32>
    %5 = vector.broadcast %4 : vector<1x128xf32> to vector<8x128xf32>
    %6 = arith.addf %3, %5 : vector<8x128xf32>
    %cst_5 = arith.constant 0.000000e+00 : f32
    %7 = vector.broadcast %cst_5 : f32 to vector<8x128xf32>
    %8 = arith.maximumf %6, %7 : vector<8x128xf32>
    %9 = arith.truncf %8 : vector<8x128xf32> to vector<8x128xbf16>
    %c0_6 = arith.constant 0 : index
    %c0_7 = arith.constant 0 : index
    %10 = vector.load %arg4[%c0_6, %c0_7] : memref<128x128xbf16, #tpu.memory_space<vmem>>, vector<128x128xbf16>
    %cst_8 = arith.constant dense<0.000000e+00> : vector<8x128xf32>
    %11 = tpu.matmul %9, %10, %cst_8 {dimension_numbers = #tpu.dot_dimension_numbers<[1], [0], [0], [1], [0, 0, 1, 1], [], []>} : vector<8x128xbf16>, vector<128x128xbf16>, vector<8x128xf32> -> vector<8x128xf32>
    %c0_9 = arith.constant 0 : index
    %c0_10 = arith.constant 0 : index
    %12 = vector.load %arg5[%c0_9, %c0_10] : memref<1x128xf32, #tpu.memory_space<vmem>>, vector<1x128xf32>
    %13 = vector.broadcast %12 : vector<1x128xf32> to vector<8x128xf32>
    %14 = arith.addf %11, %13 : vector<8x128xf32>
    %cst_11 = arith.constant 0.000000e+00 : f32
    %15 = vector.broadcast %cst_11 : f32 to vector<8x128xf32>
    %16 = arith.maximumf %14, %15 : vector<8x128xf32>
    %17 = arith.truncf %16 : vector<8x128xf32> to vector<8x128xbf16>
    %c0_12 = arith.constant 0 : index
    %c0_13 = arith.constant 0 : index
    %18 = vector.load %arg6[%c0_12, %c0_13] : memref<128x128xbf16, #tpu.memory_space<vmem>>, vector<128x128xbf16>
    %cst_14 = arith.constant dense<0.000000e+00> : vector<8x128xf32>
    %19 = tpu.matmul %17, %18, %cst_14 {dimension_numbers = #tpu.dot_dimension_numbers<[1], [0], [0], [1], [0, 0, 1, 1], [], []>} : vector<8x128xbf16>, vector<128x128xbf16>, vector<8x128xf32> -> vector<8x128xf32>
    %c0_15 = arith.constant 0 : index
    %c0_16 = arith.constant 0 : index
    %20 = vector.load %arg7[%c0_15, %c0_16] : memref<1x128xf32, #tpu.memory_space<vmem>>, vector<1x128xf32>
    %21 = vector.broadcast %20 : vector<1x128xf32> to vector<8x128xf32>
    %22 = arith.addf %19, %21 : vector<8x128xf32>
    %23 = arith.truncf %22 : vector<8x128xf32> to vector<8x128xbf16>
    %c0_17 = arith.constant 0 : index
    %c0_18 = arith.constant 0 : index
    %24 = vector.load %arg8[%c0_17, %c0_18] : memref<8x128xbf16, #tpu.memory_space<vmem>>, vector<8x128xbf16>
    tpu.vector_store %arg8[%c0_17, %c0_18], %23 {strides = array<i32>} : memref<8x128xbf16, #tpu.memory_space<vmem>>, vector<8x128xbf16>,
    return
  }
  func.func @transform_0(%arg0: i32) -> (i32, i32) {
    %c0_i32 = arith.constant 0 : i32
    %c0_i32_0 = arith.constant 0 : i32
    return %arg0, %c0_i32 : i32, i32
  }
  func.func @transform_1(%arg0: i32) -> (i32, i32) {
    %c0_i32 = arith.constant 0 : i32
    %c0_i32_0 = arith.constant 0 : i32
    %c0_i32_1 = arith.constant 0 : i32
    return %c0_i32, %c0_i32_0 : i32, i32
  }
  func.func @transform_2(%arg0: i32) -> (i32, i32) {
    %c0_i32 = arith.constant 0 : i32
    %c0_i32_0 = arith.constant 0 : i32
    %c0_i32_1 = arith.constant 0 : i32
    return %c0_i32, %c0_i32_0 : i32, i32
  }
  func.func @transform_3(%arg0: i32) -> (i32, i32) {
    %c0_i32 = arith.constant 0 : i32
    %c0_i32_0 = arith.constant 0 : i32
    %c0_i32_1 = arith.constant 0 : i32
    return %c0_i32, %c0_i32_0 : i32, i32
  }
  func.func @transform_4(%arg0: i32) -> (i32, i32) {
    %c0_i32 = arith.constant 0 : i32
    %c0_i32_0 = arith.constant 0 : i32
    %c0_i32_1 = arith.constant 0 : i32
    return %c0_i32, %c0_i32_0 : i32, i32
  }
  func.func @transform_5(%arg0: i32) -> (i32, i32) {
    %c0_i32 = arith.constant 0 : i32
    %c0_i32_0 = arith.constant 0 : i32
    %c0_i32_1 = arith.constant 0 : i32
    return %c0_i32, %c0_i32_0 : i32, i32
  }
  func.func @transform_6(%arg0: i32) -> (i32, i32) {
    %c0_i32 = arith.constant 0 : i32
    %c0_i32_0 = arith.constant 0 : i32
    %c0_i32_1 = arith.constant 0 : i32
    return %c0_i32, %c0_i32_0 : i32, i32
  }
  func.func @transform_7(%arg0: i32) -> (i32, i32) {
    %c0_i32 = arith.constant 0 : i32
    %c0_i32_0 = arith.constant 0 : i32
    return %arg0, %c0_i32 : i32, i32
  }
}

</mosaic_0001>

<llo_original>
// kernel: simple_nn_forward.1
$region0: #{simple_nn_forward.1}
  #allocation0 [shape = 'u32[]', space=smem, size = 0x4, offset = 0x4, fixed_abs, tag = 'smem constant byte address 0x4 - core index']
  #allocation1 [shape = 'u32[144,128]{1,0:T(1,128)}', space=vmem, size = 0x12000, scoped, tag = 'internal scratch']
  %s0 = inlined_call_operand.vmem [shape: f32[2,784], index: 0, kind: input, shape index: {}]
  %s1 = inlined_call_operand.hbm [shape: bf16[784,128], index: 1, kind: input, shape index: {}]
  %s2 = inlined_call_operand.vmem [shape: f32[1,128], index: 2, kind: input, shape index: {}]
  %s3 = inlined_call_operand.vmem [shape: bf16[128,128], index: 3, kind: input, shape index: {}]
  %s4 = inlined_call_operand.vmem [shape: f32[1,128], index: 4, kind: input, shape index: {}]
  %s5 = inlined_call_operand.vmem [shape: bf16[128,128], index: 5, kind: input, shape index: {}]
  %s6 = inlined_call_operand.vmem [shape: f32[1,128], index: 6, kind: input, shape index: {}]
  %s7 = inlined_call_operand.vmem [shape: bf16[8,128], index: 7, kind: output, shape index: {}]
  %s8 = sld [smem:[#allocation0]]
  $region42: #{simple_nn_forward.1} parent=0
    _
  %s10 = ssub.s32 1, %s8
  %s11 = scalar_select 0, %s10, %s8
  $region1: #{simple_nn_forward.1} parent=0
    #allocation2 [shape = 'u8[200704]{0}', space=vmem, size = 0x31000, scoped, tag = 'input window, operand 1, single buffered']
    #allocation3 [shape = 's32[1]{0}', space=sflag, size = 0x4, scoped, tag = 'scoped memory for simple_nn_forward.1']
    %12 = vsyncpa [#allocation3], 0
    // Predicated region
    $region2: #{simple_nn_forward.1} parent=1 // pred_check
      _
    $region3: #{simple_nn_forward.1} parent=1 // pred_check_branch
      %14 = sbr.rel (0) target = $region5
    $region4: #{simple_nn_forward.1} parent=1 // pred_region
      _
    $region5: #{simple_nn_forward.1} parent=1 // pred_fallthru
      _
    // Predicated region
    $region6: #{simple_nn_forward.1} parent=1 // pred_check
      _
    $region7: #{simple_nn_forward.1} parent=1 // pred_check_branch
      %16 = sbr.rel (0) target = $region9
    $region8: #{simple_nn_forward.1} parent=1 // pred_region
      %s18 = ssub.s32 6272, 6272
      %19 = vsyncadd [#allocation3], %s18
      %s20 = sshll.u32 [#allocation2], 4
      %s21 = int_to_ptr.vmem [resolvable:$true] %s20
      %26 = dma.hbm_to_vmem [thread:$0]  %s1, 6272, %s21, [#allocation3], 64, 64, 4
    $region9: #{simple_nn_forward.1} parent=1 // pred_fallthru
      _
    // Predicated region
    $region10: #{simple_nn_forward.1} parent=1 // pred_check
      _
    $region11: #{simple_nn_forward.1} parent=1 // pred_check_branch
      %28 = sbr.rel (0) target = $region13
    $region12: #{simple_nn_forward.1} parent=1 // pred_region
      _
    $region13: #{simple_nn_forward.1} parent=1 // pred_fallthru
      _
    // Predicated region
    $region14: #{simple_nn_forward.1} parent=1 // pred_check
      _
    $region15: #{simple_nn_forward.1} parent=1 // pred_check_branch
      %30 = sbr.rel (0) target = $region17
    $region16: #{simple_nn_forward.1} parent=1 // pred_region
      _
    $region17: #{simple_nn_forward.1} parent=1 // pred_fallthru
      _
    // Predicated region
    $region18: #{simple_nn_forward.1} parent=1 // pred_check
      _
    $region19: #{simple_nn_forward.1} parent=1 // pred_check_branch
      %32 = sbr.rel (0) target = $region21
    $region20: #{simple_nn_forward.1} parent=1 // pred_region
      _
    $region21: #{simple_nn_forward.1} parent=1 // pred_fallthru
      _
    // Predicated region
    $region22: #{simple_nn_forward.1} parent=1 // pred_check
      _
    $region23: #{simple_nn_forward.1} parent=1 // pred_check_branch
      %34 = sbr.rel (0) target = $region25
    $region24: #{simple_nn_forward.1} parent=1 // pred_region
      _
    $region25: #{simple_nn_forward.1} parent=1 // pred_fallthru
      _
    // Predicated region
    $region26: #{simple_nn_forward.1} parent=1 // pred_check
      _
    $region27: #{simple_nn_forward.1} parent=1 // pred_check_branch
      %36 = sbr.rel (0) target = $region29
    $region28: #{simple_nn_forward.1} parent=1 // pred_region
      _
    $region29: #{simple_nn_forward.1} parent=1 // pred_fallthru
      _
    // Predicated region
    $region30: #{simple_nn_forward.1} parent=1 // pred_check
      _
    $region31: #{simple_nn_forward.1} parent=1 // pred_check_branch
      %38 = sbr.rel (0) target = $region33
    $region32: #{simple_nn_forward.1} parent=1 // pred_region
      %39 = dma.done [#allocation3], 6272
    $region33: #{simple_nn_forward.1} parent=1 // pred_fallthru
      _
    %v41 = vld [vmem:[%s0] sm:$0xff]
    %v42 = vld [vmem:[%s0 + $0x8] sm:$0x3f]
    %v43 = vld [vmem:[%s0 + $0xe] sm:$0xff]
    %v44 = vld [vmem:[%s0 + $0x16] sm:$0x3f]
    %v45 = vld [vmem:[%s0 + $0x1c] sm:$0xff]
    %v46 = vld [vmem:[%s0 + $0x24] sm:$0x3f]
    %v47 = vld [vmem:[%s0 + $0x2a] sm:$0xff]
    %v48 = vld [vmem:[%s0 + $0x32] sm:$0x3f]
    %v57 = vcombine.low %v41, %v43
    %v58 = vcombine.high %v41, %v43
    %v59 = vcombine.low %v45, %v47
    %v60 = vcombine.high %v45, %v47
    %v62 = vunpack.c.l.s4 1983009808
    %v63 = vunpack.c.0.s8 %v62
    %v64 = vlaneseq
    %v65 = vshrl.u32 %v64, 7
    %v66 = vsub.s32 %v63, %v65
    %v67 = vrot.slane %v57, %v66
    %v69 = vunpack.c.l.s4 1983009808
    %v70 = vunpack.c.0.s8 %v69
    %v71 = vlaneseq
    %v72 = vshrl.u32 %v71, 7
    %v73 = vsub.s32 %v70, %v72
    %v74 = vrot.slane %v58, %v73
    %v76 = vunpack.c.l.s4 1983009808
    %v77 = vunpack.c.0.s8 %v76
    %v78 = vlaneseq
    %v79 = vshrl.u32 %v78, 7
    %v80 = vsub.s32 %v77, %v79
    %v81 = vrot.slane %v59, %v80
    %v83 = vunpack.c.l.s4 1983009808
    %v84 = vunpack.c.0.s8 %v83
    %v85 = vlaneseq
    %v86 = vshrl.u32 %v85, 7
    %v87 = vsub.s32 %v84, %v86
    %v88 = vrot.slane %v60, %v87
    %v89 = vcombine.low %v67, %v81
    %v90 = vcombine.high %v67, %v81
    %v91 = vcombine.low %v74, %v88
    %v92 = vcombine.high %v74, %v88
    %v93 = vcombine.low %v42, %v44
    %v94 = vcombine.high %v42, %v44
    %v95 = vcombine.low %v46, %v48
    %v96 = vcombine.high %v46, %v48
    %v98 = vunpack.c.l.s4 1983009808
    %v99 = vunpack.c.0.s8 %v98
    %v100 = vlaneseq
    %v101 = vshrl.u32 %v100, 7
    %v102 = vsub.s32 %v99, %v101
    %v103 = vrot.slane %v93, %v102
    %v105 = vunpack.c.l.s4 1983009808
    %v106 = vunpack.c.0.s8 %v105
    %v107 = vlaneseq
    %v108 = vshrl.u32 %v107, 7
    %v109 = vsub.s32 %v106, %v108
    %v110 = vrot.slane %v94, %v109
    %v112 = vunpack.c.l.s4 1983009808
    %v113 = vunpack.c.0.s8 %v112
    %v114 = vlaneseq
    %v115 = vshrl.u32 %v114, 7
    %v116 = vsub.s32 %v113, %v115
    %v117 = vrot.slane %v95, %v116
    %v119 = vunpack.c.l.s4 1983009808
    %v120 = vunpack.c.0.s8 %v119
    %v121 = vlaneseq
    %v122 = vshrl.u32 %v121, 7
    %v123 = vsub.s32 %v120, %v122
    %v124 = vrot.slane %v96, %v123
    %v125 = vcombine.low %v103, %v117
    %v126 = vcombine.high %v103, %v117
    %v127 = vcombine.low %v110, %v124
    %v135 = vpack.c.bf16 %v89, %v89
    %v136 = vpack.c.bf16 %v90, %v90
    %v137 = vpack.c.bf16 %v91, %v91
    %v138 = vpack.c.bf16 %v92, %v92
    %v139 = vpack.c.bf16 %v125, %v125
    %v140 = vpack.c.bf16 %v126, %v126
    %v141 = vpack.c.bf16 %v127, %v127
    %v142 = vld [vmem:[#allocation2] sm:$0xf]
    %v143 = vld [vmem:[#allocation2 + $0x4] sm:$0xf]
    %v144 = vld [vmem:[#allocation2 + $0x8] sm:$0xf]
    %v145 = vld [vmem:[#allocation2 + $0xc] sm:$0xf]
    %v146 = vld [vmem:[#allocation2 + $0x10] sm:$0xf]
    %v147 = vld [vmem:[#allocation2 + $0x14] sm:$0xf]
    %v148 = vld [vmem:[#allocation2 + $0x18] sm:$0xf]
    %v149 = vld [vmem:[#allocation2 + $0x1c] sm:$0xf]
    %v150 = vld [vmem:[#allocation2 + $0x20] sm:$0xf]
    %v151 = vld [vmem:[#allocation2 + $0x24] sm:$0xf]
    %v152 = vld [vmem:[#allocation2 + $0x28] sm:$0xf]
    %v153 = vld [vmem:[#allocation2 + $0x2c] sm:$0xf]
    %v154 = vld [vmem:[#allocation2 + $0x30] sm:$0xf]
    %v155 = vld [vmem:[#allocation2 + $0x34] sm:$0xf]
    %v156 = vld [vmem:[#allocation2 + $0x38] sm:$0xf]
    %v157 = vld [vmem:[#allocation2 + $0x3c] sm:$0xf]
    %v158 = vld [vmem:[#allocation2 + $0x40] sm:$0xf]
    %v159 = vld [vmem:[#allocation2 + $0x44] sm:$0xf]
    %v160 = vld [vmem:[#allocation2 + $0x48] sm:$0xf]
    %v161 = vld [vmem:[#allocation2 + $0x4c] sm:$0xf]
    %v162 = vld [vmem:[#allocation2 + $0x50] sm:$0xf]
    %v163 = vld [vmem:[#allocation2 + $0x54] sm:$0xf]
    %v164 = vld [vmem:[#allocation2 + $0x58] sm:$0xf]
    %v165 = vld [vmem:[#allocation2 + $0x5c] sm:$0xf]
    %v166 = vld [vmem:[#allocation2 + $0x60] sm:$0xf]
    %v167 = vld [vmem:[#allocation2 + $0x64] sm:$0xf]
    %v168 = vld [vmem:[#allocation2 + $0x68] sm:$0xf]
    %v169 = vld [vmem:[#allocation2 + $0x6c] sm:$0xf]
    %v170 = vld [vmem:[#allocation2 + $0x70] sm:$0xf]
    %v171 = vld [vmem:[#allocation2 + $0x74] sm:$0xf]
    %v172 = vld [vmem:[#allocation2 + $0x78] sm:$0xf]
    %v173 = vld [vmem:[#allocation2 + $0x7c] sm:$0xf]
    %v174 = vld [vmem:[#allocation2 + $0x80] sm:$0xf]
    %v175 = vld [vmem:[#allocation2 + $0x84] sm:$0xf]
    %v176 = vld [vmem:[#allocation2 + $0x88] sm:$0xf]
    %v177 = vld [vmem:[#allocation2 + $0x8c] sm:$0xf]
    %v178 = vld [vmem:[#allocation2 + $0x90] sm:$0xf]
    %v179 = vld [vmem:[#allocation2 + $0x94] sm:$0xf]
    %v180 = vld [vmem:[#allocation2 + $0x98] sm:$0xf]
    %v181 = vld [vmem:[#allocation2 + $0x9c] sm:$0xf]
    %v182 = vld [vmem:[#allocation2 + $0xa0] sm:$0xf]
    %v183 = vld [vmem:[#allocation2 + $0xa4] sm:$0xf]
    %v184 = vld [vmem:[#allocation2 + $0xa8] sm:$0xf]
    %v185 = vld [vmem:[#allocation2 + $0xac] sm:$0xf]
    %v186 = vld [vmem:[#allocation2 + $0xb0] sm:$0xf]
    %v187 = vld [vmem:[#allocation2 + $0xb4] sm:$0xf]
    %v188 = vld [vmem:[#allocation2 + $0xb8] sm:$0xf]
    %v189 = vld [vmem:[#allocation2 + $0xbc] sm:$0xf]
    %v190 = vld [vmem:[#allocation2 + $0xc0] sm:$0xf]
    %v191 = vld [vmem:[#allocation2 + $0xc4] sm:$0xf]
    %v192 = vld [vmem:[#allocation2 + $0xc8] sm:$0xf]
    %v193 = vld [vmem:[#allocation2 + $0xcc] sm:$0xf]
    %v194 = vld [vmem:[#allocation2 + $0xd0] sm:$0xf]
    %v195 = vld [vmem:[#allocation2 + $0xd4] sm:$0xf]
    %v196 = vld [vmem:[#allocation2 + $0xd8] sm:$0xf]
    %v197 = vld [vmem:[#allocation2 + $0xdc] sm:$0xf]
    %v198 = vld [vmem:[#allocation2 + $0xe0] sm:$0xf]
    %v199 = vld [vmem:[#allocation2 + $0xe4] sm:$0xf]
    %v200 = vld [vmem:[#allocation2 + $0xe8] sm:$0xf]
    %v201 = vld [vmem:[#allocation2 + $0xec] sm:$0xf]
    %v202 = vld [vmem:[#allocation2 + $0xf0] sm:$0xf]
    %v203 = vld [vmem:[#allocation2 + $0xf4] sm:$0xf]
    %v204 = vld [vmem:[#allocation2 + $0xf8] sm:$0xf]
    %v205 = vld [vmem:[#allocation2 + $0xfc] sm:$0xf]
    %v206 = vld [vmem:[#allocation2 + $0x100] sm:$0xf]
    %v207 = vld [vmem:[#allocation2 + $0x104] sm:$0xf]
    %v208 = vld [vmem:[#allocation2 + $0x108] sm:$0xf]
    %v209 = vld [vmem:[#allocation2 + $0x10c] sm:$0xf]
    %v210 = vld [vmem:[#allocation2 + $0x110] sm:$0xf]
    %v211 = vld [vmem:[#allocation2 + $0x114] sm:$0xf]
    %v212 = vld [vmem:[#allocation2 + $0x118] sm:$0xf]
    %v213 = vld [vmem:[#allocation2 + $0x11c] sm:$0xf]
    %v214 = vld [vmem:[#allocation2 + $0x120] sm:$0xf]
    %v215 = vld [vmem:[#allocation2 + $0x124] sm:$0xf]
    %v216 = vld [vmem:[#allocation2 + $0x128] sm:$0xf]
    %v217 = vld [vmem:[#allocation2 + $0x12c] sm:$0xf]
    %v218 = vld [vmem:[#allocation2 + $0x130] sm:$0xf]
    %v219 = vld [vmem:[#allocation2 + $0x134] sm:$0xf]
    %v220 = vld [vmem:[#allocation2 + $0x138] sm:$0xf]
    %v221 = vld [vmem:[#allocation2 + $0x13c] sm:$0xf]
    %v222 = vld [vmem:[#allocation2 + $0x140] sm:$0xf]
    %v223 = vld [vmem:[#allocation2 + $0x144] sm:$0xf]
    %v224 = vld [vmem:[#allocation2 + $0x148] sm:$0xf]
    %v225 = vld [vmem:[#allocation2 + $0x14c] sm:$0xf]
    %v226 = vld [vmem:[#allocation2 + $0x150] sm:$0xf]
    %v227 = vld [vmem:[#allocation2 + $0x154] sm:$0xf]
    %v228 = vld [vmem:[#allocation2 + $0x158] sm:$0xf]
    %v229 = vld [vmem:[#allocation2 + $0x15c] sm:$0xf]
    %v230 = vld [vmem:[#allocation2 + $0x160] sm:$0xf]
    %v231 = vld [vmem:[#allocation2 + $0x164] sm:$0xf]
    %v232 = vld [vmem:[#allocation2 + $0x168] sm:$0xf]
    %v233 = vld [vmem:[#allocation2 + $0x16c] sm:$0xf]
    %v234 = vld [vmem:[#allocation2 + $0x170] sm:$0xf]
    %v235 = vld [vmem:[#allocation2 + $0x174] sm:$0xf]
    %v236 = vld [vmem:[#allocation2 + $0x178] sm:$0xf]
    %v237 = vld [vmem:[#allocation2 + $0x17c] sm:$0xf]
    %v238 = vld [vmem:[#allocation2 + $0x180] sm:$0xf]
    %v239 = vld [vmem:[#allocation2 + $0x184] sm:$0xf]
    %v240 = vld [vmem:[%s2] sm:$0x1]
    %v242 = vlaneseq
    %v243 = vshrl.u32 %v242, 7
    %v244 = vsub.s32 0, %v243
    %v245 = vrot.slane %v240, %v244
    %v345 = vunpack.c.l.b16 %v142
    %v346 = vunpack.c.l.b16 %v143
    %v347 = vunpack.c.l.b16 %v144
    %v348 = vunpack.c.l.b16 %v145
    %v349 = vunpack.c.l.b16 %v146
    %v350 = vunpack.c.l.b16 %v147
    %v351 = vunpack.c.l.b16 %v148
    %v352 = vunpack.c.l.b16 %v149
    %v353 = vunpack.c.l.b16 %v150
    %v354 = vunpack.c.l.b16 %v151
    %v355 = vunpack.c.l.b16 %v152
    %v356 = vunpack.c.l.b16 %v153
    %v357 = vunpack.c.l.b16 %v154
    %v358 = vunpack.c.l.b16 %v155
    %v359 = vunpack.c.l.b16 %v156
    %v360 = vunpack.c.l.b16 %v157
    %v361 = vunpack.c.l.b16 %v158
    %v362 = vunpack.c.l.b16 %v159
    %v363 = vunpack.c.l.b16 %v160
    %v364 = vunpack.c.l.b16 %v161
    %v365 = vunpack.c.l.b16 %v162
    %v366 = vunpack.c.l.b16 %v163
    %v367 = vunpack.c.l.b16 %v164
    %v368 = vunpack.c.l.b16 %v165
    %v369 = vunpack.c.l.b16 %v166
    %v370 = vunpack.c.l.b16 %v167
    %v371 = vunpack.c.l.b16 %v168
    %v372 = vunpack.c.l.b16 %v169
    %v373 = vunpack.c.l.b16 %v170
    %v374 = vunpack.c.l.b16 %v171
    %v375 = vunpack.c.l.b16 %v172
    %v376 = vunpack.c.l.b16 %v173
    %v377 = vunpack.c.l.b16 %v174
    %v378 = vunpack.c.l.b16 %v175
    %v379 = vunpack.c.l.b16 %v176
    %v380 = vunpack.c.l.b16 %v177
    %v381 = vunpack.c.l.b16 %v178
    %v382 = vunpack.c.l.b16 %v179
    %v383 = vunpack.c.l.b16 %v180
    %v384 = vunpack.c.l.b16 %v181
    %v385 = vunpack.c.l.b16 %v182
    %v386 = vunpack.c.l.b16 %v183
    %v387 = vunpack.c.l.b16 %v184
    %v388 = vunpack.c.l.b16 %v185
    %v389 = vunpack.c.l.b16 %v186
    %v390 = vunpack.c.l.b16 %v187
    %v391 = vunpack.c.l.b16 %v188
    %v392 = vunpack.c.l.b16 %v189
    %v393 = vunpack.c.l.b16 %v190
    %v394 = vunpack.c.l.b16 %v191
    %v395 = vunpack.c.l.b16 %v192
    %v396 = vunpack.c.l.b16 %v193
    %v397 = vunpack.c.l.b16 %v194
    %v398 = vunpack.c.l.b16 %v195
    %v399 = vunpack.c.l.b16 %v196
    %v400 = vunpack.c.l.b16 %v197
    %v401 = vunpack.c.l.b16 %v198
    %v402 = vunpack.c.l.b16 %v199
    %v403 = vunpack.c.l.b16 %v200
    %v404 = vunpack.c.l.b16 %v201
    %v405 = vunpack.c.l.b16 %v202
    %v406 = vunpack.c.l.b16 %v203
    %v407 = vunpack.c.l.b16 %v204
    %v408 = vunpack.c.l.b16 %v205
    %v409 = vunpack.c.l.b16 %v206
    %v410 = vunpack.c.l.b16 %v207
    %v411 = vunpack.c.l.b16 %v208
    %v412 = vunpack.c.l.b16 %v209
    %v413 = vunpack.c.l.b16 %v210
    %v414 = vunpack.c.l.b16 %v211
    %v415 = vunpack.c.l.b16 %v212
    %v416 = vunpack.c.l.b16 %v213
    %v417 = vunpack.c.l.b16 %v214
    %v418 = vunpack.c.l.b16 %v215
    %v419 = vunpack.c.l.b16 %v216
    %v420 = vunpack.c.l.b16 %v217
    %v421 = vunpack.c.l.b16 %v218
    %v422 = vunpack.c.l.b16 %v219
    %v423 = vunpack.c.l.b16 %v220
    %v424 = vunpack.c.l.b16 %v221
    %v425 = vunpack.c.l.b16 %v222
    %v426 = vunpack.c.l.b16 %v223
    %v427 = vunpack.c.l.b16 %v224
    %v428 = vunpack.c.l.b16 %v225
    %v429 = vunpack.c.l.b16 %v226
    %v430 = vunpack.c.l.b16 %v227
    %v431 = vunpack.c.l.b16 %v228
    %v432 = vunpack.c.l.b16 %v229
    %v433 = vunpack.c.l.b16 %v230
    %v434 = vunpack.c.l.b16 %v231
    %v435 = vunpack.c.l.b16 %v232
    %v436 = vunpack.c.l.b16 %v233
    %v437 = vunpack.c.l.b16 %v234
    %v438 = vunpack.c.l.b16 %v235
    %v439 = vunpack.c.l.b16 %v236
    %v440 = vunpack.c.l.b16 %v237
    %v441 = vunpack.c.l.b16 %v238
    %v442 = vunpack.c.l.b16 %v239
    %v443 = vpack.c.b16 %v346, %v345
    %v444 = vpack.c.b16 %v348, %v347
    %v445 = vpack.c.b16 %v350, %v349
    %v446 = vpack.c.b16 %v352, %v351
    %v447 = vpack.c.b16 %v354, %v353
    %v448 = vpack.c.b16 %v356, %v355
    %v449 = vpack.c.b16 %v358, %v357
    %v450 = vpack.c.b16 %v360, %v359
    %v451 = vpack.c.b16 %v362, %v361
    %v452 = vpack.c.b16 %v364, %v363
    %v453 = vpack.c.b16 %v366, %v365
    %v454 = vpack.c.b16 %v368, %v367
    %v455 = vpack.c.b16 %v370, %v369
    %v456 = vpack.c.b16 %v372, %v371
    %v457 = vpack.c.b16 %v374, %v373
    %v458 = vpack.c.b16 %v376, %v375
    %v459 = vpack.c.b16 %v378, %v377
    %v460 = vpack.c.b16 %v380, %v379
    %v461 = vpack.c.b16 %v382, %v381
    %v462 = vpack.c.b16 %v384, %v383
    %v463 = vpack.c.b16 %v386, %v385
    %v464 = vpack.c.b16 %v388, %v387
    %v465 = vpack.c.b16 %v390, %v389
    %v466 = vpack.c.b16 %v392, %v391
    %v467 = vpack.c.b16 %v394, %v393
    %v468 = vpack.c.b16 %v396, %v395
    %v469 = vpack.c.b16 %v398, %v397
    %v470 = vpack.c.b16 %v400, %v399
    %v471 = vpack.c.b16 %v402, %v401
    %v472 = vpack.c.b16 %v404, %v403
    %v473 = vpack.c.b16 %v406, %v405
    %v474 = vpack.c.b16 %v408, %v407
    %v475 = vpack.c.b16 %v410, %v409
    %v476 = vpack.c.b16 %v412, %v411
    %v477 = vpack.c.b16 %v414, %v413
    %v478 = vpack.c.b16 %v416, %v415
    %v479 = vpack.c.b16 %v418, %v417
    %v480 = vpack.c.b16 %v420, %v419
    %v481 = vpack.c.b16 %v422, %v421
    %v482 = vpack.c.b16 %v424, %v423
    %v483 = vpack.c.b16 %v426, %v425
    %v484 = vpack.c.b16 %v428, %v427
    %v485 = vpack.c.b16 %v430, %v429
    %v486 = vpack.c.b16 %v432, %v431
    %v487 = vpack.c.b16 %v434, %v433
    %v488 = vpack.c.b16 %v436, %v435
    %v489 = vpack.c.b16 %v438, %v437
    %v490 = vpack.c.b16 %v440, %v439
    %v491 = vpack.c.b16 %v442, %v441
    %vm541 = vcmask 130048
    %v543 = vsel %vm541, %v141, 0
    %545 = vmatprep.subr.bf16.mxu0 0
    %546 = vmatpush1.bf16.msra.mxu0 %v443
    %547 = vmatprep.subr.bf16.mxu0 0
    %548 = vmatpush1.bf16.msra.mxu0 %v444
    %549 = vmatprep.subr.bf16.mxu0 0
    %550 = vmatpush1.bf16.msra.mxu0 %v445
    %551 = vmatprep.subr.bf16.mxu0 0
    %552 = vmatpush1.bf16.msra.mxu0 %v446
    %553 = vmatprep.subr.bf16.mxu0 0
    %554 = vmatpush1.bf16.msra.mxu0 %v447
    %555 = vmatprep.subr.bf16.mxu0 0
    %556 = vmatpush1.bf16.msra.mxu0 %v448
    %557 = vmatprep.subr.bf16.mxu0 0
    %558 = vmatpush1.bf16.msra.mxu0 %v449
    %559 = vmatprep.subr.bf16.mxu0 0
    %560 = vmatpush1.bf16.msra.mxu0 %v450
    %561 = vmatprep.subr.bf16.mxu0 0
    %562 = vmatpush1.bf16.msra.mxu0 %v451
    %563 = vmatprep.subr.bf16.mxu0 0
    %564 = vmatpush1.bf16.msra.mxu0 %v452
    %565 = vmatprep.subr.bf16.mxu0 0
    %566 = vmatpush1.bf16.msra.mxu0 %v453
    %567 = vmatprep.subr.bf16.mxu0 0
    %568 = vmatpush1.bf16.msra.mxu0 %v454
    %569 = vmatprep.subr.bf16.mxu0 0
    %570 = vmatpush1.bf16.msra.mxu0 %v455
    %571 = vmatprep.subr.bf16.mxu0 0
    %572 = vmatpush1.bf16.msra.mxu0 %v456
    %573 = vmatprep.subr.bf16.mxu0 0
    %574 = vmatpush1.bf16.msra.mxu0 %v457
    %575 = vmatprep.subr.bf16.mxu0 0
    %576 = vmatpush1.bf16.msra.mxu0 %v458
    %577 = vmatprep.mubr.bf16.mxu0 %v136
    %578 = vmatmul.mubr.bf16.gmra.mrb[0].mxu0 %v135
    %v579 = vpop.f32.mrb[0].mxu0
    %v580 = vadd.f32 %v245, %v579
    %v581 = vpop.f32.mrb[0].mxu0
    %v582 = vpop.f32.mrb[0].mxu0
    %v583 = vpop.f32.mrb[0].mxu0
    %584 = vdwg.mxu0
    %585 = vmatprep.subr.bf16.mxu0 0
    %586 = vmatpush1.bf16.msra.mxu0 %v459
    %587 = vmatprep.subr.bf16.mxu0 0
    %588 = vmatpush1.bf16.msra.mxu0 %v460
    %589 = vmatprep.subr.bf16.mxu0 0
    %590 = vmatpush1.bf16.msra.mxu0 %v461
    %591 = vmatprep.subr.bf16.mxu0 0
    %592 = vmatpush1.bf16.msra.mxu0 %v462
    %593 = vmatprep.subr.bf16.mxu0 0
    %594 = vmatpush1.bf16.msra.mxu0 %v463
    %595 = vmatprep.subr.bf16.mxu0 0
    %596 = vmatpush1.bf16.msra.mxu0 %v464
    %597 = vmatprep.subr.bf16.mxu0 0
    %598 = vmatpush1.bf16.msra.mxu0 %v465
    %599 = vmatprep.subr.bf16.mxu0 0
    %600 = vmatpush1.bf16.msra.mxu0 %v466
    %601 = vmatprep.subr.bf16.mxu0 0
    %602 = vmatpush1.bf16.msra.mxu0 %v467
    %603 = vmatprep.subr.bf16.mxu0 0
    %604 = vmatpush1.bf16.msra.mxu0 %v468
    %605 = vmatprep.subr.bf16.mxu0 0
    %606 = vmatpush1.bf16.msra.mxu0 %v469
    %607 = vmatprep.subr.bf16.mxu0 0
    %608 = vmatpush1.bf16.msra.mxu0 %v470
    %609 = vmatprep.subr.bf16.mxu0 0
    %610 = vmatpush1.bf16.msra.mxu0 %v471
    %611 = vmatprep.subr.bf16.mxu0 0
    %612 = vmatpush1.bf16.msra.mxu0 %v472
    %613 = vmatprep.subr.bf16.mxu0 0
    %614 = vmatpush1.bf16.msra.mxu0 %v473
    %615 = vmatprep.subr.bf16.mxu0 0
    %616 = vmatpush1.bf16.msra.mxu0 %v474
    %617 = vmatprep.mubr.bf16.mxu0 %v138
    %618 = vmatmul.mubr.bf16.gmra.mrb[0].mxu0 %v137
    %v619 = vpop.f32.mrb[0].mxu0
    %v620 = vadd.f32 %v580, %v619
    %v621 = vpop.f32.mrb[0].mxu0
    %v622 = vpop.f32.mrb[0].mxu0
    %v623 = vpop.f32.mrb[0].mxu0
    %624 = vdwg.mxu0
    %625 = vmatprep.subr.bf16.mxu0 0
    %626 = vmatpush1.bf16.msra.mxu0 %v475
    %627 = vmatprep.subr.bf16.mxu0 0
    %628 = vmatpush1.bf16.msra.mxu0 %v476
    %629 = vmatprep.subr.bf16.mxu0 0
    %630 = vmatpush1.bf16.msra.mxu0 %v477
    %631 = vmatprep.subr.bf16.mxu0 0
    %632 = vmatpush1.bf16.msra.mxu0 %v478
    %633 = vmatprep.subr.bf16.mxu0 0
    %634 = vmatpush1.bf16.msra.mxu0 %v479
    %635 = vmatprep.subr.bf16.mxu0 0
    %636 = vmatpush1.bf16.msra.mxu0 %v480
    %637 = vmatprep.subr.bf16.mxu0 0
    %638 = vmatpush1.bf16.msra.mxu0 %v481
    %639 = vmatprep.subr.bf16.mxu0 0
    %640 = vmatpush1.bf16.msra.mxu0 %v482
    %641 = vmatprep.subr.bf16.mxu0 0
    %642 = vmatpush1.bf16.msra.mxu0 %v483
    %643 = vmatprep.subr.bf16.mxu0 0
    %644 = vmatpush1.bf16.msra.mxu0 %v484
    %645 = vmatprep.subr.bf16.mxu0 0
    %646 = vmatpush1.bf16.msra.mxu0 %v485
    %647 = vmatprep.subr.bf16.mxu0 0
    %648 = vmatpush1.bf16.msra.mxu0 %v486
    %649 = vmatprep.subr.bf16.mxu0 0
    %650 = vmatpush1.bf16.msra.mxu0 %v487
    %651 = vmatprep.subr.bf16.mxu0 0
    %652 = vmatpush1.bf16.msra.mxu0 %v488
    %653 = vmatprep.subr.bf16.mxu0 0
    %654 = vmatpush1.bf16.msra.mxu0 %v489
    %655 = vmatprep.subr.bf16.mxu0 0
    %656 = vmatpush1.bf16.msra.mxu0 %v490
    %657 = vmatprep.mubr.bf16.mxu0 %v140
    %658 = vmatmul.mubr.bf16.gmra.mrb[0].mxu0 %v139
    %v659 = vpop.f32.mrb[0].mxu0
    %v660 = vadd.f32 %v620, %v659
    %v661 = vpop.f32.mrb[0].mxu0
    %v662 = vpop.f32.mrb[0].mxu0
    %v663 = vpop.f32.mrb[0].mxu0
    %664 = vdwg.mxu0
    %665 = vmatprep.subr.bf16.mxu0 0
    %666 = vmatpush1.bf16.msra.mxu0 %v491
    %667 = vmatprep.subr.bf16.mxu0 0
    %668 = vmatpush1.bf16.msra.mxu0 0
    %669 = vmatprep.subr.bf16.mxu0 0
    %670 = vmatpush1.bf16.msra.mxu0 0
    %671 = vmatprep.subr.bf16.mxu0 0
    %672 = vmatpush1.bf16.msra.mxu0 0
    %673 = vmatprep.subr.bf16.mxu0 0
    %674 = vmatpush1.bf16.msra.mxu0 0
    %675 = vmatprep.subr.bf16.mxu0 0
    %676 = vmatpush1.bf16.msra.mxu0 0
    %677 = vmatprep.subr.bf16.mxu0 0
    %678 = vmatpush1.bf16.msra.mxu0 0
    %679 = vmatprep.subr.bf16.mxu0 0
    %680 = vmatpush1.bf16.msra.mxu0 0
    %681 = vmatprep.subr.bf16.mxu0 0
    %682 = vmatpush1.bf16.msra.mxu0 0
    %683 = vmatprep.subr.bf16.mxu0 0
    %684 = vmatpush1.bf16.msra.mxu0 0
    %685 = vmatprep.subr.bf16.mxu0 0
    %686 = vmatpush1.bf16.msra.mxu0 0
    %687 = vmatprep.subr.bf16.mxu0 0
    %688 = vmatpush1.bf16.msra.mxu0 0
    %689 = vmatprep.subr.bf16.mxu0 0
    %690 = vmatpush1.bf16.msra.mxu0 0
    %691 = vmatprep.subr.bf16.mxu0 0
    %692 = vmatpush1.bf16.msra.mxu0 0
    %693 = vmatprep.subr.bf16.mxu0 0
    %694 = vmatpush1.bf16.msra.mxu0 0
    %695 = vmatprep.subr.bf16.mxu0 0
    %696 = vmatpush1.bf16.msra.mxu0 0
    %697 = vmatprep.mubr.bf16.mxu0 0
    %698 = vmatmul.mubr.bf16.gmra.mrb[0].mxu0 %v543
    %v699 = vpop.f32.mrb[0].mxu0
    %v700 = vadd.f32 %v660, %v699
    %v701 = vpop.f32.mrb[0].mxu0
    %v702 = vpop.f32.mrb[0].mxu0
    %v703 = vpop.f32.mrb[0].mxu0
    %704 = vdwg.mxu0
    %v705 = vmax.f32 %v700, 0.0
    %v706 = vpack.c.bf16 %v705, %v705
    %v707 = vld [vmem:[%s3] sm:$0xf]
    %v708 = vld [vmem:[%s3 + $0x4] sm:$0xf]
    %v709 = vld [vmem:[%s3 + $0x8] sm:$0xf]
    %v710 = vld [vmem:[%s3 + $0xc] sm:$0xf]
    %v711 = vld [vmem:[%s3 + $0x10] sm:$0xf]
    %v712 = vld [vmem:[%s3 + $0x14] sm:$0xf]
    %v713 = vld [vmem:[%s3 + $0x18] sm:$0xf]
    %v714 = vld [vmem:[%s3 + $0x1c] sm:$0xf]
    %v715 = vld [vmem:[%s3 + $0x20] sm:$0xf]
    %v716 = vld [vmem:[%s3 + $0x24] sm:$0xf]
    %v717 = vld [vmem:[%s3 + $0x28] sm:$0xf]
    %v718 = vld [vmem:[%s3 + $0x2c] sm:$0xf]
    %v719 = vld [vmem:[%s3 + $0x30] sm:$0xf]
    %v720 = vld [vmem:[%s3 + $0x34] sm:$0xf]
    %v721 = vld [vmem:[%s3 + $0x38] sm:$0xf]
    %v722 = vld [vmem:[%s3 + $0x3c] sm:$0xf]
    %v723 = vld [vmem:[%s4] sm:$0x1]
    %v725 = vlaneseq
    %v726 = vshrl.u32 %v725, 7
    %v727 = vsub.s32 0, %v726
    %v728 = vrot.slane %v723, %v727
    %v746 = vunpack.c.l.b16 %v707
    %v747 = vunpack.c.l.b16 %v708
    %v748 = vunpack.c.l.b16 %v709
    %v749 = vunpack.c.l.b16 %v710
    %v750 = vunpack.c.l.b16 %v711
    %v751 = vunpack.c.l.b16 %v712
    %v752 = vunpack.c.l.b16 %v713
    %v753 = vunpack.c.l.b16 %v714
    %v754 = vunpack.c.l.b16 %v715
    %v755 = vunpack.c.l.b16 %v716
    %v756 = vunpack.c.l.b16 %v717
    %v757 = vunpack.c.l.b16 %v718
    %v758 = vunpack.c.l.b16 %v719
    %v759 = vunpack.c.l.b16 %v720
    %v760 = vunpack.c.l.b16 %v721
    %v761 = vunpack.c.l.b16 %v722
    %v762 = vpack.c.b16 %v747, %v746
    %v763 = vpack.c.b16 %v749, %v748
    %v764 = vpack.c.b16 %v751, %v750
    %v765 = vpack.c.b16 %v753, %v752
    %v766 = vpack.c.b16 %v755, %v754
    %v767 = vpack.c.b16 %v757, %v756
    %v768 = vpack.c.b16 %v759, %v758
    %v769 = vpack.c.b16 %v761, %v760
    %778 = vmatprep.subr.bf16.mxu0 0
    %779 = vmatpush1.bf16.msra.mxu0 %v762
    %780 = vmatprep.subr.bf16.mxu0 0
    %781 = vmatpush1.bf16.msra.mxu0 %v763
    %782 = vmatprep.subr.bf16.mxu0 0
    %783 = vmatpush1.bf16.msra.mxu0 %v764
    %784 = vmatprep.subr.bf16.mxu0 0
    %785 = vmatpush1.bf16.msra.mxu0 %v765
    %786 = vmatprep.subr.bf16.mxu0 0
    %787 = vmatpush1.bf16.msra.mxu0 %v766
    %788 = vmatprep.subr.bf16.mxu0 0
    %789 = vmatpush1.bf16.msra.mxu0 %v767
    %790 = vmatprep.subr.bf16.mxu0 0
    %791 = vmatpush1.bf16.msra.mxu0 %v768
    %792 = vmatprep.subr.bf16.mxu0 0
    %793 = vmatpush1.bf16.msra.mxu0 %v769
    %794 = vmatprep.subr.bf16.mxu0 0
    %795 = vmatpush1.bf16.msra.mxu0 0
    %796 = vmatprep.subr.bf16.mxu0 0
    %797 = vmatpush1.bf16.msra.mxu0 0
    %798 = vmatprep.subr.bf16.mxu0 0
    %799 = vmatpush1.bf16.msra.mxu0 0
    %800 = vmatprep.subr.bf16.mxu0 0
    %801 = vmatpush1.bf16.msra.mxu0 0
    %802 = vmatprep.subr.bf16.mxu0 0
    %803 = vmatpush1.bf16.msra.mxu0 0
    %804 = vmatprep.subr.bf16.mxu0 0
    %805 = vmatpush1.bf16.msra.mxu0 0
    %806 = vmatprep.subr.bf16.mxu0 0
    %807 = vmatpush1.bf16.msra.mxu0 0
    %808 = vmatprep.subr.bf16.mxu0 0
    %809 = vmatpush1.bf16.msra.mxu0 0
    %810 = vmatprep.mubr.bf16.mxu0 0
    %811 = vmatmul.mubr.bf16.gmra.mrb[0].mxu0 %v706
    %v812 = vpop.f32.mrb[0].mxu0
    %v813 = vadd.f32 %v728, %v812
    %v814 = vpop.f32.mrb[0].mxu0
    %v815 = vpop.f32.mrb[0].mxu0
    %v816 = vpop.f32.mrb[0].mxu0
    %817 = vdwg.mxu0
    %v818 = vmax.f32 %v813, 0.0
    %v819 = vpack.c.bf16 %v818, %v818
    %v820 = vld [vmem:[%s5] sm:$0xf]
    %v821 = vld [vmem:[%s5 + $0x4] sm:$0xf]
    %v822 = vld [vmem:[%s5 + $0x8] sm:$0xf]
    %v823 = vld [vmem:[%s5 + $0xc] sm:$0xf]
    %v824 = vld [vmem:[%s5 + $0x10] sm:$0xf]
    %v825 = vld [vmem:[%s5 + $0x14] sm:$0xf]
    %v826 = vld [vmem:[%s5 + $0x18] sm:$0xf]
    %v827 = vld [vmem:[%s5 + $0x1c] sm:$0xf]
    %v828 = vld [vmem:[%s5 + $0x20] sm:$0xf]
    %v829 = vld [vmem:[%s5 + $0x24] sm:$0xf]
    %v830 = vld [vmem:[%s5 + $0x28] sm:$0xf]
    %v831 = vld [vmem:[%s5 + $0x2c] sm:$0xf]
    %v832 = vld [vmem:[%s5 + $0x30] sm:$0xf]
    %v833 = vld [vmem:[%s5 + $0x34] sm:$0xf]
    %v834 = vld [vmem:[%s5 + $0x38] sm:$0xf]
    %v835 = vld [vmem:[%s5 + $0x3c] sm:$0xf]
    %v836 = vld [vmem:[%s6] sm:$0x1]
    %v838 = vlaneseq
    %v839 = vshrl.u32 %v838, 7
    %v840 = vsub.s32 0, %v839
    %v841 = vrot.slane %v836, %v840
    %v859 = vunpack.c.l.b16 %v820
    %v860 = vunpack.c.l.b16 %v821
    %v861 = vunpack.c.l.b16 %v822
    %v862 = vunpack.c.l.b16 %v823
    %v863 = vunpack.c.l.b16 %v824
    %v864 = vunpack.c.l.b16 %v825
    %v865 = vunpack.c.l.b16 %v826
    %v866 = vunpack.c.l.b16 %v827
    %v867 = vunpack.c.l.b16 %v828
    %v868 = vunpack.c.l.b16 %v829
    %v869 = vunpack.c.l.b16 %v830
    %v870 = vunpack.c.l.b16 %v831
    %v871 = vunpack.c.l.b16 %v832
    %v872 = vunpack.c.l.b16 %v833
    %v873 = vunpack.c.l.b16 %v834
    %v874 = vunpack.c.l.b16 %v835
    %v875 = vpack.c.b16 %v860, %v859
    %v876 = vpack.c.b16 %v862, %v861
    %v877 = vpack.c.b16 %v864, %v863
    %v878 = vpack.c.b16 %v866, %v865
    %v879 = vpack.c.b16 %v868, %v867
    %v880 = vpack.c.b16 %v870, %v869
    %v881 = vpack.c.b16 %v872, %v871
    %v882 = vpack.c.b16 %v874, %v873
    %891 = vmatprep.subr.bf16.mxu0 0
    %892 = vmatpush1.bf16.msra.mxu0 %v875
    %893 = vmatprep.subr.bf16.mxu0 0
    %894 = vmatpush1.bf16.msra.mxu0 %v876
    %895 = vmatprep.subr.bf16.mxu0 0
    %896 = vmatpush1.bf16.msra.mxu0 %v877
    %897 = vmatprep.subr.bf16.mxu0 0
    %898 = vmatpush1.bf16.msra.mxu0 %v878
    %899 = vmatprep.subr.bf16.mxu0 0
    %900 = vmatpush1.bf16.msra.mxu0 %v879
    %901 = vmatprep.subr.bf16.mxu0 0
    %902 = vmatpush1.bf16.msra.mxu0 %v880
    %903 = vmatprep.subr.bf16.mxu0 0
    %904 = vmatpush1.bf16.msra.mxu0 %v881
    %905 = vmatprep.subr.bf16.mxu0 0
    %906 = vmatpush1.bf16.msra.mxu0 %v882
    %907 = vmatprep.subr.bf16.mxu0 0
    %908 = vmatpush1.bf16.msra.mxu0 0
    %909 = vmatprep.subr.bf16.mxu0 0
    %910 = vmatpush1.bf16.msra.mxu0 0
    %911 = vmatprep.subr.bf16.mxu0 0
    %912 = vmatpush1.bf16.msra.mxu0 0
    %913 = vmatprep.subr.bf16.mxu0 0
    %914 = vmatpush1.bf16.msra.mxu0 0
    %915 = vmatprep.subr.bf16.mxu0 0
    %916 = vmatpush1.bf16.msra.mxu0 0
    %917 = vmatprep.subr.bf16.mxu0 0
    %918 = vmatpush1.bf16.msra.mxu0 0
    %919 = vmatprep.subr.bf16.mxu0 0
    %920 = vmatpush1.bf16.msra.mxu0 0
    %921 = vmatprep.subr.bf16.mxu0 0
    %922 = vmatpush1.bf16.msra.mxu0 0
    %923 = vmatprep.mubr.bf16.mxu0 0
    %924 = vmatmul.mubr.bf16.gmra.mrb[0].mxu0 %v819
    %v925 = vpop.f32.mrb[0].mxu0
    %v926 = vadd.f32 %v841, %v925
    %v927 = vpop.f32.mrb[0].mxu0
    %v928 = vpop.f32.mrb[0].mxu0
    %v929 = vpop.f32.mrb[0].mxu0
    %930 = vdwg.mxu0
    %v931 = vpack.c.bf16 %v926, %v926
    %932 = vst [vmem:[%s7] sm:$0xf] %v931
    // Predicated region
    $region34: #{simple_nn_forward.1} parent=1 // pred_check
      _
    $region35: #{simple_nn_forward.1} parent=1 // pred_check_branch
      %934 = sbr.rel (0) target = $region37
    $region36: #{simple_nn_forward.1} parent=1 // pred_region
      _
    $region37: #{simple_nn_forward.1} parent=1 // pred_fallthru
      _
    // Predicated region
    $region38: #{simple_nn_forward.1} parent=1 // pred_check
      _
    $region39: #{simple_nn_forward.1} parent=1 // pred_check_branch
      %936 = sbr.rel (0) target = $region41
    $region40: #{simple_nn_forward.1} parent=1 // pred_region
      _
    $region41: #{simple_nn_forward.1} parent=1 // pred_fallthru
      _
    %937 = vsyncpa [#allocation3], 1

</llo_original>
